<compile_context>
chip_gen: v6e
topology: v6e:2x2x1
jax: 0.10.0
libtpu: 0.0.40
codegen_flags: <defaults>
</compile_context>

<pallas_src>
import functools

import jax
import jax.numpy as jnp
from jax.experimental import pallas as pl
from jax.experimental.pallas import tpu as pltpu


def _round_up(x, m):
    return ((x + m - 1) // m) * m


def _custom_loss_kernel(pred_ref, tgt_ref, eval_ref, out_ref, acc_ref, *,
                        reg_scale, eval_scale, n_rows, n_cols,
                        need_row_mask, need_col_mask, hard_targets):
    i = pl.program_id(0)          # row-tile index
    j = pl.program_id(1)          # col-tile index
    nb = pl.num_programs(0)
    nc = pl.num_programs(1)
    tile_b, tile_n = pred_ref.shape
    nsub = tile_b // 8            # tile_b is always a multiple of 8

    @pl.when((i == 0) & (j == 0))
    def _():
        acc_ref[...] = jnp.zeros_like(acc_ref)

    rows_rem = n_rows - i * tile_b       # valid rows in this tile
    cols_rem = n_cols - j * tile_n       # valid cols in this tile

    col_mask = None
    if need_col_mask:
        col_idx = jax.lax.broadcasted_iota(jnp.int32, (8, tile_n), 1)
        col_mask = col_idx < cols_rem

    # Process the tile as 8-row strips: keeps intermediates tiny (a few vregs),
    # does the sublane partial-reduce for free on the VPU, and leaves a single
    # read-modify-write of the small (8, tile_n) accumulator per grid step.
    part = jnp.zeros((8, tile_n), jnp.float32)
    for s in range(nsub):
        sl = pl.ds(s * 8, 8)
        p = pred_ref[sl, :].astype(jnp.float32)
        t = tgt_ref[sl, :].astype(jnp.float32)
        if hard_targets:
            # One log per element (valid only for hard 0/1 targets).
            x = jnp.where(t > 0.5, p, 1.0 - p)
            bce = -jnp.maximum(jnp.log(x), -100.0)
        else:
            log_p = jnp.maximum(jnp.log(p), -100.0)       # PyTorch BCE log clamp
            log_1mp = jnp.maximum(jnp.log1p(-p), -100.0)
            # bce = -(t*log_p + (1-t)*log_1mp) == -(log_1mp + t*(log_p - log_1mp))
            bce = -(log_1mp + t * (log_p - log_1mp))
        mask = col_mask
        if need_row_mask:
            row_idx = jax.lax.broadcasted_iota(jnp.int32, (8, tile_n), 0) + s * 8
            rmask = row_idx < rows_rem
            mask = rmask if mask is None else (rmask & mask)
        if mask is not None:
            bce = jnp.where(mask, bce, 0.0)    # drop garbage/NaN lanes BEFORE accumulate
        part = part + bce
    acc_ref[...] += part

    @pl.when((i == nb - 1) & (j == nc - 1))
    def _():
        # Single cross-lane reduction + scaling, once per kernel.
        reg = reg_scale * jnp.sum(acc_ref[...])
        # BCE(evaluations, ones): per-element loss is -log(e), clamped.
        log_e = jnp.maximum(jnp.log(eval_ref[...].astype(jnp.float32)), -100.0)
        out_ref[0, 0] = reg + eval_scale * jnp.sum(-log_e)


def custom_loss(predictions, targets, evaluations, *, eval_weight,
                regular_weight, tile_b=512, tile_n=None, hard_targets=False):
    """predictions/targets: (B, N) in [0,1]; evaluations: (E,) in [0,1]."""
    predictions = jnp.asarray(predictions)
    targets = jnp.asarray(targets)
    evaluations = jnp.asarray(evaluations)
    # Accept f32 / bf16 as-is (bf16 halves HBM bytes for this memory-bound kernel);
    # everything else is promoted to f32.  Upcast to f32 happens inside the kernel.
    if predictions.dtype not in (jnp.float32, jnp.bfloat16):
        predictions = predictions.astype(jnp.float32)
    if targets.dtype not in (jnp.float32, jnp.bfloat16):
        targets = targets.astype(jnp.float32)
    evaluations = evaluations.astype(jnp.float32)

    B, N = predictions.shape
    E = int(evaluations.shape[0])

    # jit-safe reproduction of the module's bounds warning (no device->host sync).
    oob = jnp.any((evaluations < 0.0) | (evaluations > 1.0))
    jax.lax.cond(
        oob,
        lambda e: jax.debug.print("Warning: Evaluation outside of bounds\n{}", e),
        lambda e: None,
        evaluations,
    )

    # ---- Tiling / VMEM budget (generation-aware) ----
    vmem_cap = 64 * 1024 * 1024                     # conservative fallback (v7x per-TC)
    try:
        vmem_cap = int(pltpu.get_tpu_info().vmem_capacity_bytes)
    except Exception:
        pass
    vmem_budget = min(vmem_cap // 3, 24 * 1024 * 1024)

    in_bytes = predictions.dtype.itemsize + targets.dtype.itemsize

    def block_bytes(tb, tn):
        # 2 pipeline buffers per input + the (8, tn) f32 accumulator.
        return 2 * tb * tn * in_bytes + 8 * tn * 4

    # Column tiling only when even an 8-row full-width block would blow the budget.
    if tile_n is None:
        tile_n = N
        if block_bytes(8, N) > vmem_budget:
            tile_n = max(128, (vmem_budget // (2 * 8 * in_bytes + 32)) // 128 * 128)
    if tile_n >= N:
        tile_n = N                                   # full-width block (legal for any N)
    else:
        tile_n = max(128, (int(tile_n) // 128) * 128)  # partial blocks must be 128-aligned

    max_tile_b = (vmem_budget - 8 * tile_n * 4) // max(1, 2 * tile_n * in_bytes)
    max_tile_b = max(8, (max_tile_b // 8) * 8)
    tile_b = max(8, min((int(tile_b) // 8) * 8, max_tile_b, _round_up(B, 8)))

    nb = pl.cdiv(B, tile_b)
    nc = pl.cdiv(N, tile_n)
    need_row_mask = (B % tile_b) != 0
    need_col_mask = (N % tile_n) != 0

    eval2d = evaluations.reshape(1, E)               # metadata only, no HBM copy

    kernel = functools.partial(
        _custom_loss_kernel,
        reg_scale=float(regular_weight) / float(B * N),
        eval_scale=float(eval_weight) / float(E),
        n_rows=B, n_cols=N,
        need_row_mask=need_row_mask,
        need_col_mask=need_col_mask,
        hard_targets=bool(hard_targets),
    )

    vmem_limit = int(min(
        vmem_cap,
        max(32 * 1024 * 1024,
            block_bytes(tile_b, tile_n) + 2 * _round_up(E, 128) * 4 + 8 * 1024 * 1024),
    ))

    out = pl.pallas_call(
        kernel,
        out_shape=jax.ShapeDtypeStruct((1, 1), jnp.float32),
        grid_spec=pltpu.PrefetchScalarGridSpec(
            num_scalar_prefetch=0,
            grid=(nb, nc),
            in_specs=[
                pl.BlockSpec((tile_b, tile_n), lambda i, j: (i, j)),
                pl.BlockSpec((tile_b, tile_n), lambda i, j: (i, j)),
                pl.BlockSpec((1, E), lambda i, j: (0, 0)),   # resident across the grid
            ],
            out_specs=pl.BlockSpec(memory_space=pltpu.SMEM),
            scratch_shapes=[pltpu.VMEM((8, tile_n), jnp.float32)],
        ),
        compiler_params=pltpu.CompilerParams(
            dimension_semantics=("arbitrary", "arbitrary"),
            vmem_limit_bytes=vmem_limit,
        ),
    )(predictions, targets, eval2d)
    return out[0, 0]


def _reference(predictions, targets, evaluations, *, eval_weight, regular_weight):
    log_p = jnp.maximum(jnp.log(predictions), -100.0)
    log_1mp = jnp.maximum(jnp.log1p(-predictions), -100.0)
    reg = regular_weight * jnp.mean(-(targets * log_p + (1.0 - targets) * log_1mp))
    eval_loss = eval_weight * jnp.mean(-jnp.maximum(jnp.log(evaluations), -100.0))
    return reg + eval_loss


if __name__ == "__main__":
    key = jax.random.PRNGKey(0)
    k1, k2, k3 = jax.random.split(key, 3)

    # Small, non-aligned shapes to exercise unpadded blocks + tail masking.
    B, N = 24, 200    # predictions / targets
    E = 100           # number of evaluations

    predictions = jax.nn.sigmoid(jax.random.normal(k1, (B, N), dtype=jnp.float32))
    targets = (jax.random.uniform(k2, (B, N)) > 0.5).astype(jnp.float32)
    evaluations = jax.nn.sigmoid(jax.random.normal(k3, (E,), dtype=jnp.float32))

    eval_weight = 0.3
    regular_weight = 1.0

    ref = _reference(predictions, targets, evaluations,
                     eval_weight=eval_weight, regular_weight=regular_weight)

    # Single-block path (tile covers the whole input; no masking).
    total = jax.block_until_ready(custom_loss(
        predictions, targets, evaluations,
        eval_weight=eval_weight, regular_weight=regular_weight))
    assert jnp.allclose(total, ref, rtol=1e-5, atol=1e-6), (total, ref)

    # Multi-row-tile path with a ragged row tail (24 rows, 16-row tiles -> masked tail).
    total_rows = jax.block_until_ready(custom_loss(
        predictions, targets, evaluations,
        eval_weight=eval_weight, regular_weight=regular_weight, tile_b=16))
    assert jnp.allclose(total_rows, ref, rtol=1e-5, atol=1e-6), (total_rows, ref)

    # 2-D grid path: 128-wide column tiles with a ragged 72-column tail.
    total_2d = jax.block_until_ready(custom_loss(
        predictions, targets, evaluations,
        eval_weight=eval_weight, regular_weight=regular_weight,
        tile_b=8, tile_n=128))
    assert jnp.allclose(total_2d, ref, rtol=1e-5, atol=1e-6), (total_2d, ref)

    # One-log fast path (valid here because targets are hard 0/1).
    total_hard = jax.block_until_ready(custom_loss(
        predictions, targets, evaluations,
        eval_weight=eval_weight, regular_weight=regular_weight,
        hard_targets=True))
    assert jnp.allclose(total_hard, ref, rtol=1e-4, atol=1e-5), (total_hard, ref)

    # TODO(synk): at shapes this small a standalone pallas_call is pure launch
    # overhead; in production fold this loss into an adjacent kernel's epilogue.
    print("KERNEL_OK")
</pallas_src>

<mosaic_0001>
module attributes {stable_mosaic.version = 11 : i64} {
  func.func @_custom_loss_kernel(%arg0: i32, %arg1: i32, %arg2: memref<24x200xf32, #tpu.memory_space<vmem>>, %arg3: memref<24x200xf32, #tpu.memory_space<vmem>>, %arg4: memref<1x100xf32, #tpu.memory_space<vmem>>, %arg5: memref<1x1xf32, #tpu.memory_space<smem>>, %arg6: memref<8x200xf32, #tpu.memory_space<vmem>>) attributes {dimension_semantics = [#tpu.dimension_semantics<arbitrary>, #tpu.dimension_semantics<arbitrary>], iteration_bounds = array<i64: 1, 1>, scalar_prefetch = 0 : i64, scratch_operands = 1 : i64, tpu.core_type = #tpu.core_type<tc>, window_params = [{transform_indices = @transform_0, window_bounds = array<i64: 24, 200>}, {transform_indices = @transform_1, window_bounds = array<i64: 24, 200>}, {pipeline_mode = #tpu.pipeline_mode<synchronous>, transform_indices = @transform_2, window_bounds = array<i64: 1, 100>}, {transform_indices = @transform_3, window_bounds = array<i64: 1, 1>}]} {
    %c0_i32 = arith.constant 0 : i32
    %0 = arith.cmpi eq, %arg0, %c0_i32 : i32
    %c0_i32_0 = arith.constant 0 : i32
    %1 = arith.cmpi eq, %arg1, %c0_i32_0 : i32
    %2 = arith.andi %0, %1 : i1
    %3 = arith.extui %2 : i1 to i32
    %c0_i32_1 = arith.constant 0 : i32
    %4 = arith.cmpi ne, %3, %c0_i32_1 : i32
    scf.if %4 {
      %cst_30 = arith.constant 0.000000e+00 : f32
      %62 = vector.broadcast %cst_30 : f32 to vector<8x200xf32>
      %c0_31 = arith.constant 0 : index
      %c0_32 = arith.constant 0 : index
      %63 = vector.load %arg6[%c0_31, %c0_32] : memref<8x200xf32, #tpu.memory_space<vmem>>, vector<8x200xf32>
      tpu.vector_store %arg6[%c0_31, %c0_32], %62 {strides = array<i32>} : memref<8x200xf32, #tpu.memory_space<vmem>>, vector<8x200xf32>,
    } else {
    }
    %cst = arith.constant 0.000000e+00 : f32
    %5 = vector.broadcast %cst : f32 to vector<8x200xf32>
    %c0 = arith.constant 0 : index
    %c0_2 = arith.constant 0 : index
    %6 = vector.load %arg2[%c0, %c0_2] : memref<24x200xf32, #tpu.memory_space<vmem>>, vector<8x200xf32>
    %c0_3 = arith.constant 0 : index
    %c0_4 = arith.constant 0 : index
    %7 = vector.load %arg3[%c0_3, %c0_4] : memref<24x200xf32, #tpu.memory_space<vmem>>, vector<8x200xf32>
    %8 = math.log %6 : vector<8x200xf32>
    %cst_5 = arith.constant -1.000000e+02 : f32
    %9 = vector.broadcast %cst_5 : f32 to vector<8x200xf32>
    %10 = arith.maximumf %8, %9 : vector<8x200xf32>
    %cst_6 = arith.constant 0.000000e+00 : f32
    %11 = vector.broadcast %cst_6 : f32 to vector<8x200xf32>
    %12 = arith.subf %11, %6 : vector<8x200xf32>
    %13 = math.log1p %12 : vector<8x200xf32>
    %cst_7 = arith.constant -1.000000e+02 : f32
    %14 = vector.broadcast %cst_7 : f32 to vector<8x200xf32>
    %15 = arith.maximumf %13, %14 : vector<8x200xf32>
    %16 = arith.subf %10, %15 : vector<8x200xf32>
    %17 = arith.mulf %7, %16 : vector<8x200xf32>
    %18 = arith.addf %15, %17 : vector<8x200xf32>
    %cst_8 = arith.constant 0.000000e+00 : f32
    %19 = vector.broadcast %cst_8 : f32 to vector<8x200xf32>
    %20 = arith.subf %19, %18 : vector<8x200xf32>
    %21 = arith.addf %5, %20 : vector<8x200xf32>
    %c8 = arith.constant 8 : index
    %c0_9 = arith.constant 0 : index
    %22 = vector.load %arg2[%c8, %c0_9] : memref<24x200xf32, #tpu.memory_space<vmem>>, vector<8x200xf32>
    %c8_10 = arith.constant 8 : index
    %c0_11 = arith.constant 0 : index
    %23 = vector.load %arg3[%c8_10, %c0_11] : memref<24x200xf32, #tpu.memory_space<vmem>>, vector<8x200xf32>
    %24 = math.log %22 : vector<8x200xf32>
    %cst_12 = arith.constant -1.000000e+02 : f32
    %25 = vector.broadcast %cst_12 : f32 to vector<8x200xf32>
    %26 = arith.maximumf %24, %25 : vector<8x200xf32>
    %cst_13 = arith.constant 0.000000e+00 : f32
    %27 = vector.broadcast %cst_13 : f32 to vector<8x200xf32>
    %28 = arith.subf %27, %22 : vector<8x200xf32>
    %29 = math.log1p %28 : vector<8x200xf32>
    %cst_14 = arith.constant -1.000000e+02 : f32
    %30 = vector.broadcast %cst_14 : f32 to vector<8x200xf32>
    %31 = arith.maximumf %29, %30 : vector<8x200xf32>
    %32 = arith.subf %26, %31 : vector<8x200xf32>
    %33 = arith.mulf %23, %32 : vector<8x200xf32>
    %34 = arith.addf %31, %33 : vector<8x200xf32>
    %cst_15 = arith.constant 0.000000e+00 : f32
    %35 = vector.broadcast %cst_15 : f32 to vector<8x200xf32>
    %36 = arith.subf %35, %34 : vector<8x200xf32>
    %37 = arith.addf %21, %36 : vector<8x200xf32>
    %c16 = arith.constant 16 : index
    %c0_16 = arith.constant 0 : index
    %38 = vector.load %arg2[%c16, %c0_16] : memref<24x200xf32, #tpu.memory_space<vmem>>, vector<8x200xf32>
    %c16_17 = arith.constant 16 : index
    %c0_18 = arith.constant 0 : index
    %39 = vector.load %arg3[%c16_17, %c0_18] : memref<24x200xf32, #tpu.memory_space<vmem>>, vector<8x200xf32>
    %40 = math.log %38 : vector<8x200xf32>
    %cst_19 = arith.constant -1.000000e+02 : f32
    %41 = vector.broadcast %cst_19 : f32 to vector<8x200xf32>
    %42 = arith.maximumf %40, %41 : vector<8x200xf32>
    %cst_20 = arith.constant 0.000000e+00 : f32
    %43 = vector.broadcast %cst_20 : f32 to vector<8x200xf32>
    %44 = arith.subf %43, %38 : vector<8x200xf32>
    %45 = math.log1p %44 : vector<8x200xf32>
    %cst_21 = arith.constant -1.000000e+02 : f32
    %46 = vector.broadcast %cst_21 : f32 to vector<8x200xf32>
    %47 = arith.maximumf %45, %46 : vector<8x200xf32>
    %48 = arith.subf %42, %47 : vector<8x200xf32>
    %49 = arith.mulf %39, %48 : vector<8x200xf32>
    %50 = arith.addf %47, %49 : vector<8x200xf32>
    %cst_22 = arith.constant 0.000000e+00 : f32
    %51 = vector.broadcast %cst_22 : f32 to vector<8x200xf32>
    %52 = arith.subf %51, %50 : vector<8x200xf32>
    %53 = arith.addf %37, %52 : vector<8x200xf32>
    %c0_23 = arith.constant 0 : index
    %c0_24 = arith.constant 0 : index
    %54 = vector.load %arg6[%c0_23, %c0_24] : memref<8x200xf32, #tpu.memory_space<vmem>>, vector<8x200xf32>
    %55 = arith.addf %54, %53 : vector<8x200xf32>
    %c0_25 = arith.constant 0 : index
    %c0_26 = arith.constant 0 : index
    %56 = vector.load %arg6[%c0_25, %c0_26] : memref<8x200xf32, #tpu.memory_space<vmem>>, vector<8x200xf32>
    tpu.vector_store %arg6[%c0_25, %c0_26], %55 {strides = array<i32>} : memref<8x200xf32, #tpu.memory_space<vmem>>, vector<8x200xf32>,
    %c0_i32_27 = arith.constant 0 : i32
    %57 = arith.cmpi eq, %arg0, %c0_i32_27 : i32
    %c0_i32_28 = arith.constant 0 : i32
    %58 = arith.cmpi eq, %arg1, %c0_i32_28 : i32
    %59 = arith.andi %57, %58 : i1
    %60 = arith.extui %59 : i1 to i32
    %c0_i32_29 = arith.constant 0 : i32
    %61 = arith.cmpi ne, %60, %c0_i32_29 : i32
    scf.if %61 {
      %c0_30 = arith.constant 0 : index
      %c0_31 = arith.constant 0 : index
      %62 = vector.load %arg6[%c0_30, %c0_31] : memref<8x200xf32, #tpu.memory_space<vmem>>, vector<8x200xf32>
      %63 = vector.shape_cast %62 : vector<8x200xf32> to vector<1x8x200xf32>
      %cst_32 = arith.constant dense<0.000000e+00> : vector<1xf32>
      %64 = vector.multi_reduction <add>, %63, %cst_32 [1, 2] : vector<1x8x200xf32> to vector<1xf32>
      %65 = vector.shape_cast %64 : vector<1xf32> to vector<1x1x1xf32>
      %66 = vector.extract %65[0, 0, 0] : f32 from vector<1x1x1xf32>
      %cst_33 = arith.constant 2.08333338E-4 : f32
      %67 = arith.mulf %cst_33, %66 : f32
      %c0_34 = arith.constant 0 : index
      %c0_35 = arith.constant 0 : index
      %68 = vector.load %arg4[%c0_34, %c0_35] : memref<1x100xf32, #tpu.memory_space<vmem>>, vector<1x100xf32>
      %69 = math.log %68 : vector<1x100xf32>
      %cst_36 = arith.constant -1.000000e+02 : f32
      %70 = vector.broadcast %cst_36 : f32 to vector<1x100xf32>
      %71 = arith.maximumf %69, %70 : vector<1x100xf32>
      %cst_37 = arith.constant 0.000000e+00 : f32
      %72 = vector.broadcast %cst_37 : f32 to vector<1x100xf32>
      %73 = arith.subf %72, %71 : vector<1x100xf32>
      %74 = vector.shape_cast %73 : vector<1x100xf32> to vector<1x1x100xf32>
      %cst_38 = arith.constant dense<0.000000e+00> : vector<1xf32>
      %75 = vector.multi_reduction <add>, %74, %cst_38 [1, 2] : vector<1x1x100xf32> to vector<1xf32>
      %76 = vector.shape_cast %75 : vector<1xf32> to vector<1x1x1xf32>
      %77 = vector.extract %76[0, 0, 0] : f32 from vector<1x1x1xf32>
      %cst_39 = arith.constant 3.000000e-03 : f32
      %78 = arith.mulf %cst_39, %77 : f32
      %79 = arith.addf %67, %78 : f32
      %c0_40 = arith.constant 0 : index
      %c0_41 = arith.constant 0 : index
      %80 = memref.load %arg5[%c0_40, %c0_41] : memref<1x1xf32, #tpu.memory_space<smem>>
      memref.store %79, %arg5[%c0_40, %c0_41] : memref<1x1xf32, #tpu.memory_space<smem>>
    } else {
    }
    return
  }
  func.func @transform_0(%arg0: i32, %arg1: i32) -> (i32, i32) {
    %c0_i32 = arith.constant 0 : i32
    return %arg0, %arg1 : i32, i32
  }
  func.func @transform_1(%arg0: i32, %arg1: i32) -> (i32, i32) {
    %c0_i32 = arith.constant 0 : i32
    return %arg0, %arg1 : i32, i32
  }
  func.func @transform_2(%arg0: i32, %arg1: i32) -> (i32, i32) {
    %c0_i32 = arith.constant 0 : i32
    %c0_i32_0 = arith.constant 0 : i32
    %c0_i32_1 = arith.constant 0 : i32
    return %c0_i32, %c0_i32_0 : i32, i32
  }
  func.func @transform_3(%arg0: i32, %arg1: i32) -> (i32, i32) {
    %c0_i32 = arith.constant 0 : i32
    %c0_i32_0 = arith.constant 0 : i32
    %c0_i32_1 = arith.constant 0 : i32
    return %c0_i32, %c0_i32_0 : i32, i32
  }
}

</mosaic_0001>

<llo_original>
// kernel: tpu_custom_call.1
$region0: #{tpu_custom_call.1}
  #allocation0 [shape = 'u32[]', space=smem, size = 0x4, offset = 0x4, fixed_abs, tag = 'smem constant byte address 0x4 - core index']
  #allocation1 [shape = 'u32[144,128]{1,0:T(1,128)}', space=vmem, size = 0x12000, scoped, tag = 'internal scratch']
  #allocation2 [shape = 'f32[8,200]{1,0:T(8,128)}', space=vmem, size = 0x2000, scoped, tag = 'scratch operand']
  %s0 = inlined_call_operand.hbm [shape: f32[24,200], index: 0, kind: input, shape index: {}]
  %s1 = inlined_call_operand.hbm [shape: f32[24,200], index: 1, kind: input, shape index: {}]
  %s2 = inlined_call_operand.vmem [shape: f32[1,100], index: 2, kind: input, shape index: {}]
  %s3 = inlined_call_operand.hbm [shape: f32[1,1], index: 3, kind: output, shape index: {}]
  %s4 = sld [smem:[#allocation0]]
  $region38: #{tpu_custom_call.1} parent=0
    _
  %s6 = ssub.s32 1, %s4
  %s7 = scalar_select 0, %s6, %s4
  $region1: #{tpu_custom_call.1} parent=0
    #allocation3 [shape = 'u8[24576]{0}', space=vmem, size = 0x6000, scoped, tag = 'input window, operand 0, single buffered']
    #allocation4 [shape = 's32[1]{0}', space=sflag, size = 0x4, scoped, tag = 'scoped memory for tpu_custom_call.1']
    #allocation5 [shape = 's32[1]{0}', space=sflag, size = 0x4, scoped, tag = 'scoped memory for tpu_custom_call.1']
    #allocation6 [shape = 'u8[24576]{0}', space=vmem, size = 0x6000, scoped, tag = 'input window, operand 1, single buffered']
    #allocation7 [shape = 's32[1]{0}', space=sflag, size = 0x4, scoped, tag = 'scoped memory for tpu_custom_call.1']
    #allocation8 [shape = 'u8[512]{0}', space=smem, size = 0x200, scoped, tag = 'output window, operand 0, single buffered']
    %8 = vsyncpa [#allocation4], 0
    %9 = vsyncpa [#allocation7], 0
    %10 = vsyncpa [#allocation5], 0
    // Predicated region
    $region2: #{tpu_custom_call.1} parent=1 // pred_check
      _
    $region3: #{tpu_custom_call.1} parent=1 // pred_check_branch
      %12 = sbr.rel (0) target = $region5
    $region4: #{tpu_custom_call.1} parent=1 // pred_region
      %s14 = ssub.s32 768, 768
      %15 = vsyncadd [#allocation4], %s14
      %s16 = sshll.u32 [#allocation3], 4
      %s17 = int_to_ptr.vmem [resolvable:$true] %s16
      %22 = dma.hbm_to_vmem [thread:$0]  %s0, 768, %s17, [#allocation4], 256, 256, 16
    $region5: #{tpu_custom_call.1} parent=1 // pred_fallthru
      _
    // Predicated region
    $region6: #{tpu_custom_call.1} parent=1 // pred_check
      _
    $region7: #{tpu_custom_call.1} parent=1 // pred_check_branch
      %24 = sbr.rel (0) target = $region9
    $region8: #{tpu_custom_call.1} parent=1 // pred_region
      %s26 = ssub.s32 768, 768
      %27 = vsyncadd [#allocation7], %s26
      %s28 = sshll.u32 [#allocation6], 4
      %s29 = int_to_ptr.vmem [resolvable:$true] %s28
      %34 = dma.hbm_to_vmem [thread:$0]  %s1, 768, %s29, [#allocation7], 256, 256, 16
    $region9: #{tpu_custom_call.1} parent=1 // pred_fallthru
      _
    // Predicated region
    $region10: #{tpu_custom_call.1} parent=1 // pred_check
      _
    $region11: #{tpu_custom_call.1} parent=1 // pred_check_branch
      %36 = sbr.rel (0) target = $region13
    $region12: #{tpu_custom_call.1} parent=1 // pred_region
      _
    $region13: #{tpu_custom_call.1} parent=1 // pred_fallthru
      _
    // Predicated region
    $region14: #{tpu_custom_call.1} parent=1 // pred_check
      _
    $region15: #{tpu_custom_call.1} parent=1 // pred_check_branch
      %38 = sbr.rel (0) target = $region17
    $region16: #{tpu_custom_call.1} parent=1 // pred_region
      %39 = dma.done [#allocation4], 768
    $region17: #{tpu_custom_call.1} parent=1 // pred_fallthru
      _
    // Predicated region
    $region18: #{tpu_custom_call.1} parent=1 // pred_check
      _
    $region19: #{tpu_custom_call.1} parent=1 // pred_check_branch
      %41 = sbr.rel (0) target = $region21
    $region20: #{tpu_custom_call.1} parent=1 // pred_region
      %42 = dma.done [#allocation7], 768
    $region21: #{tpu_custom_call.1} parent=1 // pred_fallthru
      _
    %p43 = scmp.eq.s32.totalorder 0, 0
    %p44 = scmp.eq.s32.totalorder 0, 0
    %p45 = pnand %p43, %p44
    %p46 = pneg %p45
    // Predicated region
    $region22: #{tpu_custom_call.1} parent=1 // pred_check
      _
    $region23: #{tpu_custom_call.1} parent=1 // pred_check_branch
      %48 = sbr.rel (%p45) target = $region25
    $region24: #{tpu_custom_call.1} parent=1 // pred_region
      %49 = vst [vmem:[#allocation2] sm:$0xff] 0.0
      %vm50 = vcmask 588800
      %51 = vst.msk [vmem:[#allocation2 + $0x8] sm:$0xff] %vm50, 0.0
    $region25: #{tpu_custom_call.1} parent=1 // pred_fallthru
      _
    %v52 = vld [vmem:[#allocation3] sm:$0xff]
    %v53 = vld [vmem:[#allocation3 + $0x8] sm:$0xff]
    %v54 = vld [vmem:[#allocation6] sm:$0xff]
    %v55 = vld [vmem:[#allocation6 + $0x8] sm:$0xff]
    %v56 = vlog2.pop %v52
    %v57 = vmul.f32 %v56, 0.6931472
    %v58 = vlog2.pop %v53
    %v59 = vmul.f32 %v58, 0.6931472
    %v60 = vmax.f32 %v57, -100.0
    %v61 = vmax.f32 %v59, -100.0
    %v62 = vsub.f32 0.0, %v52
    %v63 = vsub.f32 0.0, %v53
    %v64 = vadd.f32 %v62, 1.0
    %v65 = vlog2.pop %v64
    %v66 = vmul.f32 %v65, 0.6931472
    %v67 = vmul.f32 -0.5, %v62
    %v68 = vadd.f32 %v67, 1.0
    %v69 = vmul.f32 %v68, %v62
    %v70 = vand.u32 2147483647, %v62
    %vm71 = vcmp.lt.f32.partialorder %v70, 0.0004427343
    %v72 = vsel %vm71, %v69, %v66
    %v73 = vadd.f32 %v63, 1.0
    %v74 = vlog2.pop %v73
    %v75 = vmul.f32 %v74, 0.6931472
    %v76 = vmul.f32 -0.5, %v63
    %v77 = vadd.f32 %v76, 1.0
    %v78 = vmul.f32 %v77, %v63
    %v79 = vand.u32 2147483647, %v63
    %vm80 = vcmp.lt.f32.partialorder %v79, 0.0004427343
    %v81 = vsel %vm80, %v78, %v75
    %v82 = vmax.f32 %v72, -100.0
    %v83 = vmax.f32 %v81, -100.0
    %v84 = vsub.f32 %v60, %v82
    %v85 = vsub.f32 %v61, %v83
    %v86 = vmul.f32 %v54, %v84
    %v87 = vmul.f32 %v55, %v85
    %v88 = vadd.f32 %v82, %v86
    %v89 = vadd.f32 %v83, %v87
    %v90 = vsub.f32 0.0, %v88
    %v91 = vsub.f32 0.0, %v89
    %v92 = vadd.f32 %v90, 0.0
    %v93 = vadd.f32 %v91, 0.0
    %v94 = vld [vmem:[#allocation3 + $0x10] sm:$0xff]
    %v95 = vld [vmem:[#allocation3 + $0x18] sm:$0xff]
    %v96 = vld [vmem:[#allocation6 + $0x10] sm:$0xff]
    %v97 = vld [vmem:[#allocation6 + $0x18] sm:$0xff]
    %v98 = vlog2.pop %v94
    %v99 = vmul.f32 %v98, 0.6931472
    %v100 = vlog2.pop %v95
    %v101 = vmul.f32 %v100, 0.6931472
    %v102 = vmax.f32 %v99, -100.0
    %v103 = vmax.f32 %v101, -100.0
    %v104 = vsub.f32 0.0, %v94
    %v105 = vsub.f32 0.0, %v95
    %v106 = vadd.f32 %v104, 1.0
    %v107 = vlog2.pop %v106
    %v108 = vmul.f32 %v107, 0.6931472
    %v109 = vmul.f32 -0.5, %v104
    %v110 = vadd.f32 %v109, 1.0
    %v111 = vmul.f32 %v110, %v104
    %v112 = vand.u32 2147483647, %v104
    %vm113 = vcmp.lt.f32.partialorder %v112, 0.0004427343
    %v114 = vsel %vm113, %v111, %v108
    %v115 = vadd.f32 %v105, 1.0
    %v116 = vlog2.pop %v115
    %v117 = vmul.f32 %v116, 0.6931472
    %v118 = vmul.f32 -0.5, %v105
    %v119 = vadd.f32 %v118, 1.0
    %v120 = vmul.f32 %v119, %v105
    %v121 = vand.u32 2147483647, %v105
    %vm122 = vcmp.lt.f32.partialorder %v121, 0.0004427343
    %v123 = vsel %vm122, %v120, %v117
    %v124 = vmax.f32 %v114, -100.0
    %v125 = vmax.f32 %v123, -100.0
    %v126 = vsub.f32 %v102, %v124
    %v127 = vsub.f32 %v103, %v125
    %v128 = vmul.f32 %v96, %v126
    %v129 = vmul.f32 %v97, %v127
    %v130 = vadd.f32 %v124, %v128
    %v131 = vadd.f32 %v125, %v129
    %v132 = vsub.f32 0.0, %v130
    %v133 = vsub.f32 0.0, %v131
    %v134 = vadd.f32 %v92, %v132
    %v135 = vadd.f32 %v93, %v133
    %v136 = vld [vmem:[#allocation3 + $0x20] sm:$0xff]
    %v137 = vld [vmem:[#allocation3 + $0x28] sm:$0xff]
    %v138 = vld [vmem:[#allocation6 + $0x20] sm:$0xff]
    %v139 = vld [vmem:[#allocation6 + $0x28] sm:$0xff]
    %v140 = vlog2.pop %v136
    %v141 = vmul.f32 %v140, 0.6931472
    %v142 = vlog2.pop %v137
    %v143 = vmul.f32 %v142, 0.6931472
    %v144 = vmax.f32 %v141, -100.0
    %v145 = vmax.f32 %v143, -100.0
    %v146 = vsub.f32 0.0, %v136
    %v147 = vsub.f32 0.0, %v137
    %v148 = vadd.f32 %v146, 1.0
    %v149 = vlog2.pop %v148
    %v150 = vmul.f32 %v149, 0.6931472
    %v151 = vmul.f32 -0.5, %v146
    %v152 = vadd.f32 %v151, 1.0
    %v153 = vmul.f32 %v152, %v146
    %v154 = vand.u32 2147483647, %v146
    %vm155 = vcmp.lt.f32.partialorder %v154, 0.0004427343
    %v156 = vsel %vm155, %v153, %v150
    %v157 = vadd.f32 %v147, 1.0
    %v158 = vlog2.pop %v157
    %v159 = vmul.f32 %v158, 0.6931472
    %v160 = vmul.f32 -0.5, %v147
    %v161 = vadd.f32 %v160, 1.0
    %v162 = vmul.f32 %v161, %v147
    %v163 = vand.u32 2147483647, %v147
    %vm164 = vcmp.lt.f32.partialorder %v163, 0.0004427343
    %v165 = vsel %vm164, %v162, %v159
    %v166 = vmax.f32 %v156, -100.0
    %v167 = vmax.f32 %v165, -100.0
    %v168 = vsub.f32 %v144, %v166
    %v169 = vsub.f32 %v145, %v167
    %v170 = vmul.f32 %v138, %v168
    %v171 = vmul.f32 %v139, %v169
    %v172 = vadd.f32 %v166, %v170
    %v173 = vadd.f32 %v167, %v171
    %v174 = vsub.f32 0.0, %v172
    %v175 = vsub.f32 0.0, %v173
    %v176 = vadd.f32 %v134, %v174
    %v177 = vadd.f32 %v135, %v175
    %v178 = vld [vmem:[#allocation2] sm:$0xff]
    %v179 = vld [vmem:[#allocation2 + $0x8] sm:$0xff]
    %v180 = vadd.f32 %v178, %v176
    %v181 = vadd.f32 %v179, %v177
    %182 = vst [vmem:[#allocation2] sm:$0xff] %v180
    %vm183 = vcmask 588800
    %184 = vst.msk [vmem:[#allocation2 + $0x8] sm:$0xff] %vm183, %v181
    // Predicated region
    $region26: #{tpu_custom_call.1} parent=1 // pred_check
      _
    $region27: #{tpu_custom_call.1} parent=1 // pred_check_branch
      %186 = sbr.rel (%p45) target = $region29
    $region28: #{tpu_custom_call.1} parent=1 // pred_region
      %v187 = vld [vmem:[#allocation2] sm:$0xff]
      %v188 = vld [vmem:[#allocation2 + $0x8] sm:$0xff]
      %v189 = vsel %vm183, %v188, 0.0
      %v190 = vadd.f32 %v187, %v189
      %191 = vadd.xlane.f32.xlu0 %v190
      %v192 = vpop.xlane.xlu0 %191
      %v193 = vrot.slane %v192, 4
      %v194 = vadd.f32 %v192, %v193
      %v195 = vrot.slane %v194, 2
      %v196 = vadd.f32 %v194, %v195
      %v197 = vrot.slane %v196, 1
      %v198 = vadd.f32 %v196, %v197
      %s199 = vtos %v198
      %s200 = smul.f32 %s199, 0.00020833334
      %v201 = vld [vmem:[%s2] sm:$0x1]
      %v202 = vlog2.pop %v201
      %v203 = vmul.f32 %v202, 0.6931472
      %v204 = vmax.f32 %v203, -100.0
      %v205 = vsub.f32 0.0, %v204
      %vm206 = vcmask 811008
      %v207 = vsel %vm206, %v205, 0.0
      %208 = vadd.xlane.f32.xlu0 %v207
      %v209 = vpop.xlane.xlu0 %208
      %v210 = vrot.slane %v209, 4
      %v211 = vadd.f32 %v209, %v210
      %v212 = vrot.slane %v211, 2
      %v213 = vadd.f32 %v211, %v212
      %v214 = vrot.slane %v213, 1
      %v215 = vadd.f32 %v213, %v214
      %s216 = vtos %v215
      %s217 = smul.f32 %s216, 0.003
      %s218 = sadd.f32 %s200, %s217
      %s219 = scalar_lea.smem [#allocation8], 0
      %220 = sst [smem:[%s219]] %s218
    $region29: #{tpu_custom_call.1} parent=1 // pred_fallthru
      _
    // Predicated region
    $region30: #{tpu_custom_call.1} parent=1 // pred_check
      _
    $region31: #{tpu_custom_call.1} parent=1 // pred_check_branch
      %222 = sbr.rel (0) target = $region33
    $region32: #{tpu_custom_call.1} parent=1 // pred_region
      %s224 = ssub.s32 16, 16
      %225 = vsyncadd [#allocation5], %s224
      %228 = dma.smem_to_hbm [#allocation8], 16, %s3, [#allocation5]
    $region33: #{tpu_custom_call.1} parent=1 // pred_fallthru
      _
    // Predicated region
    $region34: #{tpu_custom_call.1} parent=1 // pred_check
      _
    $region35: #{tpu_custom_call.1} parent=1 // pred_check_branch
      %230 = sbr.rel (0) target = $region37
    $region36: #{tpu_custom_call.1} parent=1 // pred_region
      %231 = dma.done [#allocation5], 16
    $region37: #{tpu_custom_call.1} parent=1 // pred_fallthru
      _
    %232 = sfence
    %233 = vsyncpa [#allocation4], 1
    %234 = vsyncpa [#allocation7], 1
    %235 = vsyncpa [#allocation5], 1

</llo_original>
